<compile_context>
chip_gen: v6e
topology: v6e:2x2x1
jax: 0.10.0
libtpu: 0.0.40
codegen_flags: <defaults>
</compile_context>

<pallas_src>
import functools

import jax
import jax.numpy as jnp
from jax.experimental import pallas as pl
from jax.experimental.pallas import tpu as pltpu


def _softmax_lastdim(v):
    m = jnp.max(v, axis=-1, keepdims=True)
    e = jnp.exp(v - m)
    s = jnp.sum(e, axis=-1, keepdims=True)
    # approx reciprocal runs on the EUP slot (nearly free); one Newton step
    # restores ~f32 accuracy: rel err ~(2^-12)^2.
    r = pl.reciprocal(s, approx=True)
    r = r * (2.0 - s * r)
    return e * r


def battle_kernel(x_ref, wp_ref, bp_ref, w2_ref, b2_ref, wo_ref, bo_ref, o_ref):
    # x_ref: (M, 2D) activations; rows are [channel-0 pixels | channel-1 pixels].
    # The 1x1 conv and the first two Linears are already folded into wp/bp.
    wdt = wp_ref.dtype                       # f32 or bf16 (MXU accumulates in f32)
    x = x_ref[...].astype(wdt)               # no-op when activations ship in wdt

    # (conv -> Linear(D,2D) -> Linear(2D,D)) composed: one K=2D matmul + ReLU
    h = jnp.dot(x, wp_ref[...], preferred_element_type=jnp.float32) + bp_ref[...]
    h = jnp.maximum(h, 0.0)
    # h2: Linear(D, D)
    h = jnp.dot(h.astype(wdt), w2_ref[...],
                preferred_element_type=jnp.float32) + b2_ref[...]
    # Softmax over features (torch.nn.Softmax() legacy dim=1 on a 2D input)
    h = _softmax_lastdim(h)
    # out: Linear(D, D)
    h = jnp.dot(h.astype(wdt), wo_ref[...],
                preferred_element_type=jnp.float32) + bo_ref[...]
    h = _softmax_lastdim(h)

    o_ref[...] = h


def prepare_params(params, weights_dtype=jnp.float32):
    """One-time parameter prep (call OUTSIDE the hot path).

    Folds the 1x1 conv (channel weights + bias) into the first Linear, then
    composes the first two Linear layers into a single (2D, D) weight and
    (1, D) bias. Remaining Linear weights are transposed to (in, out).
    Optionally casts the matmul weights to bf16 (biases stay f32).
    """
    cw, cb, wi, bi, w1, b1, w2, b2, wo, bo = params
    f32 = jnp.float32
    hi = jax.lax.Precision.HIGHEST

    wi_t = jnp.asarray(wi, f32).T                     # (D, 2D)
    w1_t = jnp.asarray(w1, f32).T                     # (2D, D)
    w2_t = jnp.asarray(w2, f32).T                     # (D, D)
    wo_t = jnp.asarray(wo, f32).T                     # (D, D)

    cw_flat = jnp.asarray(cw, f32).reshape(-1)        # (2,) conv channel weights
    cb0 = jnp.asarray(cb, f32).reshape(-1)[0]         # conv bias scalar

    # Fold the 1x1 conv: conv_raw = cw0*x_ch0 + cw1*x_ch1, so with x laid out
    # as [ch0 | ch1] (length 2D) we have conv_raw @ Wi_t == x @ W_in_stacked.
    w_in = jnp.concatenate([cw_flat[0] * wi_t, cw_flat[1] * wi_t], axis=0)   # (2D, 2D)
    bi_fold = jnp.asarray(bi, f32) + cb0 * wi_t.sum(axis=0)                  # (2D,)

    # Compose input (D->2D) and h1 (2D->D): no nonlinearity between them.
    w_pre = jnp.dot(w_in, w1_t, precision=hi)                                # (2D, D)
    b_pre = (jnp.dot(bi_fold, w1_t, precision=hi)
             + jnp.asarray(b1, f32)).reshape(1, -1)                          # (1, D)

    b2_f = jnp.asarray(b2, f32).reshape(1, -1)
    bo_f = jnp.asarray(bo, f32).reshape(1, -1)

    w_pre, w2_t, wo_t = (w.astype(weights_dtype) for w in (w_pre, w2_t, wo_t))
    return (w_pre, b_pre, w2_t, b2_f, wo_t, bo_f)


def _pick_bm(batch, block_m):
    """Largest tile <= block_m dividing the batch, shrunk (by halving) until the
    grid has >=4 steps when the batch allows it: >=2 steps per v7x TensorCore
    and enough steps for input-DMA / compute overlap."""
    bm = max(1, min(block_m, batch))
    while bm > 1 and batch % bm:
        bm -= 1
    while bm >= 16 and batch // bm < 4 and batch % (bm // 2) == 0:
        bm //= 2
    return bm


def _activation_spec(bm, two_d, steps):
    # Triple-buffer the activation input when the grid is deep enough; compute
    # per step is tiny, so the extra buffer hides DMA issue latency.
    if steps >= 3 and hasattr(pl, "Buffered"):
        try:
            return pl.BlockSpec((bm, two_d), lambda b: (b, 0),
                                pipeline_mode=pl.Buffered(3))
        except TypeError:  # BlockSpec without pipeline_mode support
            pass
    return pl.BlockSpec((bm, two_d), lambda b: (b, 0))


def _run(x2d, prepped, block_m):
    """Core pallas_call. x2d: (B, 2D). Returns (B, D) f32."""
    w_pre, b_pre, w2_t, b2_f, wo_t, bo_f = prepped
    B, two_d = x2d.shape
    D = w_pre.shape[1]
    assert two_d == 2 * D, "activation row length must be 2 * input_size"

    # Ship activations in the weight dtype (bf16 path halves the dominant HBM
    # read; MXU still accumulates in f32). No-op when dtypes already match.
    act_dtype = jnp.bfloat16 if w_pre.dtype == jnp.bfloat16 else jnp.float32
    x2d = x2d.astype(act_dtype)

    bm = _pick_bm(B, block_m)
    steps = B // bm

    def resident(shape):
        # Constant block index -> DMA'd once, VMEM-resident across the grid.
        return pl.BlockSpec(shape, lambda b: (0, 0))

    return pl.pallas_call(
        battle_kernel,
        out_shape=jax.ShapeDtypeStruct((B, D), jnp.float32),
        grid=(steps,),
        in_specs=[
            _activation_spec(bm, two_d, steps),            # activations, batch-tiled
            resident(w_pre.shape), resident(b_pre.shape),
            resident(w2_t.shape), resident(b2_f.shape),
            resident(wo_t.shape), resident(bo_f.shape),
        ],
        out_specs=pl.BlockSpec((bm, D), lambda b: (b, 0)),
        compiler_params=pltpu.CompilerParams(
            dimension_semantics=("parallel",)),            # batch axis shards across cores
    )(x2d, w_pre, b_pre, w2_t, b2_f, wo_t, bo_f)


@jax.jit
def battle_forward(x_nchw, prepped):
    """Original single-sample semantics: x (N, 2, H, W), N*H*W == input_size -> (input_size,).
    M=1 idles most of the MXU sublanes; batch boards with battle_forward_batched
    whenever this is on a hot path."""
    N, C, H, W = x_nchw.shape
    D = N * H * W
    assert prepped[0].shape == (2 * D, D), "input_size mismatch"
    # Channel-major flatten: first D entries are channel 0 over (n, h, w),
    # next D are channel 1 -- matches the stacked/composed weight row order.
    x2d = jnp.transpose(x_nchw, (1, 0, 2, 3)).reshape(1, 2 * D)
    return _run(x2d, prepped, block_m=8).reshape(-1)


@functools.partial(jax.jit, static_argnames=("block_m",))
def battle_forward_batched(x_bchw, prepped, block_m=512):
    """Batched eval: x (B, 2, H, W) -> (B, H*W), each board run independently.
    With the conv folded into the weights, reshape(B, 2*H*W) is a contiguous
    no-copy view -- no host-side transpose / extra HBM pass."""
    B, C, H, W = x_bchw.shape
    assert C == 2
    x2d = x_bchw.reshape(B, C * H * W)
    return _run(x2d, prepped, block_m)


def make_params(input_size, key):
    D = input_size
    ks = jax.random.split(key, 10)
    scale = 0.05
    cw = scale * jax.random.normal(ks[0], (1, 2, 1, 1), jnp.float32)
    cb = scale * jax.random.normal(ks[1], (1,), jnp.float32)
    wi = scale * jax.random.normal(ks[2], (2 * D, D), jnp.float32)
    bi = scale * jax.random.normal(ks[3], (2 * D,), jnp.float32)
    w1 = scale * jax.random.normal(ks[4], (D, 2 * D), jnp.float32)
    b1 = scale * jax.random.normal(ks[5], (D,), jnp.float32)
    w2 = scale * jax.random.normal(ks[6], (D, D), jnp.float32)
    b2 = scale * jax.random.normal(ks[7], (D,), jnp.float32)
    wo = scale * jax.random.normal(ks[8], (D, D), jnp.float32)
    bo = scale * jax.random.normal(ks[9], (D,), jnp.float32)
    return (cw, cb, wi, bi, w1, b1, w2, b2, wo, bo)


def reference_forward(x_nchw, params):
    # Pure-JAX reference mirroring the PyTorch module, layer by layer, f32.
    cw, cb, wi, bi, w1, b1, w2, b2, wo, bo = params
    hi = jax.lax.Precision.HIGHEST
    conv = (jnp.einsum('nchw,oc->nohw', x_nchw, cw[:, :, 0, 0], precision=hi)
            + cb[None, :, None, None])
    h = conv.reshape(1, -1)
    h = jnp.dot(h, wi.T, precision=hi) + bi
    h = jnp.dot(h, w1.T, precision=hi) + b1
    h = jnp.maximum(h, 0.0)
    h = jnp.dot(h, w2.T, precision=hi) + b2
    h = jax.nn.softmax(h, axis=1)
    h = jnp.dot(h, wo.T, precision=hi) + bo
    h = jax.nn.softmax(h, axis=1)
    return h.reshape(-1)


if __name__ == "__main__":
    input_size = 128            # = H*W with H=8, W=16 (N=1 per board)
    H, W = 8, 16
    key = jax.random.PRNGKey(0)
    kx, kb, kp = jax.random.split(key, 3)

    params = make_params(input_size, kp)
    prepped_f32 = prepare_params(params, weights_dtype=jnp.float32)    # done once

    # --- single-sample path (exact original module semantics) ---
    x1 = jax.random.normal(kx, (1, 2, H, W), jnp.float32)
    out1 = jax.block_until_ready(battle_forward(x1, prepped_f32))
    ref1 = reference_forward(x1, params)
    assert out1.shape == (input_size,)
    assert jnp.allclose(out1, ref1, atol=1e-5, rtol=1e-5), "single-sample mismatch"

    # --- batched path, f32 weights (>= 4 grid steps -> >= 2 per v7x core) ---
    B = 512
    xb = jax.random.normal(kb, (B, 2, H, W), jnp.float32)
    outb = jax.block_until_ready(battle_forward_batched(xb, prepped_f32))
    refb = jax.vmap(lambda x: reference_forward(x[None], params))(xb)
    assert outb.shape == (B, input_size)
    assert jnp.allclose(outb, refb, atol=1e-5, rtol=1e-5), "batched f32 mismatch"

    # --- batched path, bf16 weights + bf16 activations (native MXU path; halves HBM reads) ---
    prepped_bf16 = prepare_params(params, weights_dtype=jnp.bfloat16)  # done once
    xb_bf16 = xb.astype(jnp.bfloat16)                                  # cast once at data prep
    outb16 = jax.block_until_ready(battle_forward_batched(xb_bf16, prepped_bf16))
    assert outb16.shape == (B, input_size)
    assert jnp.allclose(outb16, refb, atol=3e-3, rtol=1e-1), "batched bf16 mismatch"

    print("KERNEL_OK")
</pallas_src>

<mosaic_0001>
module attributes {stable_mosaic.version = 11 : i64} {
  func.func @battle_kernel(%arg0: i32, %arg1: memref<1x256xf32, #tpu.memory_space<vmem>>, %arg2: memref<256x128xf32, #tpu.memory_space<vmem>>, %arg3: memref<1x128xf32, #tpu.memory_space<vmem>>, %arg4: memref<128x128xf32, #tpu.memory_space<vmem>>, %arg5: memref<1x128xf32, #tpu.memory_space<vmem>>, %arg6: memref<128x128xf32, #tpu.memory_space<vmem>>, %arg7: memref<1x128xf32, #tpu.memory_space<vmem>>, %arg8: memref<1x128xf32, #tpu.memory_space<vmem>>) attributes {dimension_semantics = [#tpu.dimension_semantics<parallel>], iteration_bounds = array<i64: 1>, scalar_prefetch = 0 : i64, scratch_operands = 0 : i64, tpu.core_type = #tpu.core_type<tc>, window_params = [{transform_indices = @transform_0, window_bounds = array<i64: 1, 256>}, {pipeline_mode = #tpu.pipeline_mode<synchronous>, transform_indices = @transform_1, window_bounds = array<i64: 256, 128>}, {pipeline_mode = #tpu.pipeline_mode<synchronous>, transform_indices = @transform_2, window_bounds = array<i64: 1, 128>}, {pipeline_mode = #tpu.pipeline_mode<synchronous>, transform_indices = @transform_3, window_bounds = array<i64: 128, 128>}, {pipeline_mode = #tpu.pipeline_mode<synchronous>, transform_indices = @transform_4, window_bounds = array<i64: 1, 128>}, {pipeline_mode = #tpu.pipeline_mode<synchronous>, transform_indices = @transform_5, window_bounds = array<i64: 128, 128>}, {pipeline_mode = #tpu.pipeline_mode<synchronous>, transform_indices = @transform_6, window_bounds = array<i64: 1, 128>}, {transform_indices = @transform_7, window_bounds = array<i64: 1, 128>}]} {
    %c0 = arith.constant 0 : index
    %c0_0 = arith.constant 0 : index
    %0 = vector.load %arg1[%c0, %c0_0] : memref<1x256xf32, #tpu.memory_space<vmem>>, vector<1x256xf32>
    %c0_1 = arith.constant 0 : index
    %c0_2 = arith.constant 0 : index
    %1 = vector.load %arg2[%c0_1, %c0_2] : memref<256x128xf32, #tpu.memory_space<vmem>>, vector<256x128xf32>
    %cst = arith.constant dense<0.000000e+00> : vector<1x128xf32>
    %2 = tpu.matmul %0, %1, %cst {dimension_numbers = #tpu.dot_dimension_numbers<[1], [0], [0], [1], [0, 0, 1, 1], [], []>} : vector<1x256xf32>, vector<256x128xf32>, vector<1x128xf32> -> vector<1x128xf32>
    %c0_3 = arith.constant 0 : index
    %c0_4 = arith.constant 0 : index
    %3 = vector.load %arg3[%c0_3, %c0_4] : memref<1x128xf32, #tpu.memory_space<vmem>>, vector<1x128xf32>
    %4 = arith.addf %2, %3 : vector<1x128xf32>
    %cst_5 = arith.constant 0.000000e+00 : f32
    %5 = vector.broadcast %cst_5 : f32 to vector<1x128xf32>
    %6 = arith.maximumf %4, %5 : vector<1x128xf32>
    %c0_6 = arith.constant 0 : index
    %c0_7 = arith.constant 0 : index
    %7 = vector.load %arg4[%c0_6, %c0_7] : memref<128x128xf32, #tpu.memory_space<vmem>>, vector<128x128xf32>
    %cst_8 = arith.constant dense<0.000000e+00> : vector<1x128xf32>
    %8 = tpu.matmul %6, %7, %cst_8 {dimension_numbers = #tpu.dot_dimension_numbers<[1], [0], [0], [1], [0, 0, 1, 1], [], []>} : vector<1x128xf32>, vector<128x128xf32>, vector<1x128xf32> -> vector<1x128xf32>
    %c0_9 = arith.constant 0 : index
    %c0_10 = arith.constant 0 : index
    %9 = vector.load %arg5[%c0_9, %c0_10] : memref<1x128xf32, #tpu.memory_space<vmem>>, vector<1x128xf32>
    %10 = arith.addf %8, %9 : vector<1x128xf32>
    %cst_11 = arith.constant dense<0xFF800000> : vector<1xf32>
    %11 = vector.multi_reduction <maximumf>, %10, %cst_11 [1] : vector<1x128xf32> to vector<1xf32>
    %12 = vector.shape_cast %11 : vector<1xf32> to vector<1x1xf32>
    %13 = vector.broadcast %12 : vector<1x1xf32> to vector<1x128xf32>
    %14 = arith.subf %10, %13 : vector<1x128xf32>
    %15 = math.exp %14 : vector<1x128xf32>
    %cst_12 = arith.constant dense<0.000000e+00> : vector<1xf32>
    %16 = vector.multi_reduction <add>, %15, %cst_12 [1] : vector<1x128xf32> to vector<1xf32>
    %17 = vector.shape_cast %16 : vector<1xf32> to vector<1x1xf32>
    %18 = tpu.reciprocal %17 {approx = true} : vector<1x1xf32> -> vector<1x1xf32>
    %19 = arith.mulf %17, %18 : vector<1x1xf32>
    %cst_13 = arith.constant 2.000000e+00 : f32
    %20 = vector.broadcast %cst_13 : f32 to vector<1x1xf32>
    %21 = arith.subf %20, %19 : vector<1x1xf32>
    %22 = arith.mulf %18, %21 : vector<1x1xf32>
    %23 = vector.broadcast %22 : vector<1x1xf32> to vector<1x128xf32>
    %24 = arith.mulf %15, %23 : vector<1x128xf32>
    %c0_14 = arith.constant 0 : index
    %c0_15 = arith.constant 0 : index
    %25 = vector.load %arg6[%c0_14, %c0_15] : memref<128x128xf32, #tpu.memory_space<vmem>>, vector<128x128xf32>
    %cst_16 = arith.constant dense<0.000000e+00> : vector<1x128xf32>
    %26 = tpu.matmul %24, %25, %cst_16 {dimension_numbers = #tpu.dot_dimension_numbers<[1], [0], [0], [1], [0, 0, 1, 1], [], []>} : vector<1x128xf32>, vector<128x128xf32>, vector<1x128xf32> -> vector<1x128xf32>
    %c0_17 = arith.constant 0 : index
    %c0_18 = arith.constant 0 : index
    %27 = vector.load %arg7[%c0_17, %c0_18] : memref<1x128xf32, #tpu.memory_space<vmem>>, vector<1x128xf32>
    %28 = arith.addf %26, %27 : vector<1x128xf32>
    %cst_19 = arith.constant dense<0xFF800000> : vector<1xf32>
    %29 = vector.multi_reduction <maximumf>, %28, %cst_19 [1] : vector<1x128xf32> to vector<1xf32>
    %30 = vector.shape_cast %29 : vector<1xf32> to vector<1x1xf32>
    %31 = vector.broadcast %30 : vector<1x1xf32> to vector<1x128xf32>
    %32 = arith.subf %28, %31 : vector<1x128xf32>
    %33 = math.exp %32 : vector<1x128xf32>
    %cst_20 = arith.constant dense<0.000000e+00> : vector<1xf32>
    %34 = vector.multi_reduction <add>, %33, %cst_20 [1] : vector<1x128xf32> to vector<1xf32>
    %35 = vector.shape_cast %34 : vector<1xf32> to vector<1x1xf32>
    %36 = tpu.reciprocal %35 {approx = true} : vector<1x1xf32> -> vector<1x1xf32>
    %37 = arith.mulf %35, %36 : vector<1x1xf32>
    %cst_21 = arith.constant 2.000000e+00 : f32
    %38 = vector.broadcast %cst_21 : f32 to vector<1x1xf32>
    %39 = arith.subf %38, %37 : vector<1x1xf32>
    %40 = arith.mulf %36, %39 : vector<1x1xf32>
    %41 = vector.broadcast %40 : vector<1x1xf32> to vector<1x128xf32>
    %42 = arith.mulf %33, %41 : vector<1x128xf32>
    %c0_22 = arith.constant 0 : index
    %c0_23 = arith.constant 0 : index
    %43 = vector.load %arg8[%c0_22, %c0_23] : memref<1x128xf32, #tpu.memory_space<vmem>>, vector<1x128xf32>
    tpu.vector_store %arg8[%c0_22, %c0_23], %42 {strides = array<i32>} : memref<1x128xf32, #tpu.memory_space<vmem>>, vector<1x128xf32>,
    return
  }
  func.func @transform_0(%arg0: i32) -> (i32, i32) {
    %c0_i32 = arith.constant 0 : i32
    %c0_i32_0 = arith.constant 0 : i32
    return %arg0, %c0_i32 : i32, i32
  }
  func.func @transform_1(%arg0: i32) -> (i32, i32) {
    %c0_i32 = arith.constant 0 : i32
    %c0_i32_0 = arith.constant 0 : i32
    %c0_i32_1 = arith.constant 0 : i32
    return %c0_i32, %c0_i32_0 : i32, i32
  }
  func.func @transform_2(%arg0: i32) -> (i32, i32) {
    %c0_i32 = arith.constant 0 : i32
    %c0_i32_0 = arith.constant 0 : i32
    %c0_i32_1 = arith.constant 0 : i32
    return %c0_i32, %c0_i32_0 : i32, i32
  }
  func.func @transform_3(%arg0: i32) -> (i32, i32) {
    %c0_i32 = arith.constant 0 : i32
    %c0_i32_0 = arith.constant 0 : i32
    %c0_i32_1 = arith.constant 0 : i32
    return %c0_i32, %c0_i32_0 : i32, i32
  }
  func.func @transform_4(%arg0: i32) -> (i32, i32) {
    %c0_i32 = arith.constant 0 : i32
    %c0_i32_0 = arith.constant 0 : i32
    %c0_i32_1 = arith.constant 0 : i32
    return %c0_i32, %c0_i32_0 : i32, i32
  }
  func.func @transform_5(%arg0: i32) -> (i32, i32) {
    %c0_i32 = arith.constant 0 : i32
    %c0_i32_0 = arith.constant 0 : i32
    %c0_i32_1 = arith.constant 0 : i32
    return %c0_i32, %c0_i32_0 : i32, i32
  }
  func.func @transform_6(%arg0: i32) -> (i32, i32) {
    %c0_i32 = arith.constant 0 : i32
    %c0_i32_0 = arith.constant 0 : i32
    %c0_i32_1 = arith.constant 0 : i32
    return %c0_i32, %c0_i32_0 : i32, i32
  }
  func.func @transform_7(%arg0: i32) -> (i32, i32) {
    %c0_i32 = arith.constant 0 : i32
    %c0_i32_0 = arith.constant 0 : i32
    return %arg0, %c0_i32 : i32, i32
  }
}

</mosaic_0001>

<llo_original>
// kernel: battle_forward.1
$region0: #{battle_forward.1}
  #allocation0 [shape = 'u32[]', space=smem, size = 0x4, offset = 0x4, fixed_abs, tag = 'smem constant byte address 0x4 - core index']
  #allocation1 [shape = 'u32[144,128]{1,0:T(1,128)}', space=vmem, size = 0x12000, scoped, tag = 'internal scratch']
  %s0 = inlined_call_operand.vmem [shape: f32[1,256], index: 0, kind: input, shape index: {}]
  %s1 = inlined_call_operand.hbm [shape: f32[256,128], index: 1, kind: input, shape index: {}]
  %s2 = inlined_call_operand.vmem [shape: f32[1,128], index: 2, kind: input, shape index: {}]
  %s3 = inlined_call_operand.hbm [shape: f32[128,128], index: 3, kind: input, shape index: {}]
  %s4 = inlined_call_operand.vmem [shape: f32[1,128], index: 4, kind: input, shape index: {}]
  %s5 = inlined_call_operand.hbm [shape: f32[128,128], index: 5, kind: input, shape index: {}]
  %s6 = inlined_call_operand.vmem [shape: f32[1,128], index: 6, kind: input, shape index: {}]
  %s7 = inlined_call_operand.hbm [shape: f32[1,128], index: 7, kind: output, shape index: {}]
  %s8 = sld [smem:[#allocation0]]
  $region50: #{battle_forward.1} parent=0
    _
  %s10 = ssub.s32 1, %s8
  %s11 = scalar_select 0, %s10, %s8
  $region1: #{battle_forward.1} parent=0
    #allocation2 [shape = 'u8[131072]{0}', space=vmem, size = 0x20000, scoped, tag = 'input window, operand 1, single buffered']
    #allocation3 [shape = 's32[1]{0}', space=sflag, size = 0x4, scoped, tag = 'scoped memory for battle_forward.1']
    #allocation4 [shape = 's32[1]{0}', space=sflag, size = 0x4, scoped, tag = 'scoped memory for battle_forward.1']
    #allocation5 [shape = 'u8[65536]{0}', space=vmem, size = 0x10000, scoped, tag = 'input window, operand 3, single buffered']
    #allocation6 [shape = 's32[1]{0}', space=sflag, size = 0x4, scoped, tag = 'scoped memory for battle_forward.1']
    #allocation7 [shape = 'u8[65536]{0}', space=vmem, size = 0x10000, scoped, tag = 'input window, operand 5, single buffered']
    #allocation8 [shape = 'u8[512]{0}', space=vmem, size = 0x400, scoped, tag = 'output window, operand 0, single buffered']
    %12 = vsyncpa [#allocation3], 0
    %13 = vsyncpa [#allocation6], 0
    %14 = vsyncpa [#allocation4], 0
    // Predicated region
    $region2: #{battle_forward.1} parent=1 // pred_check
      _
    $region3: #{battle_forward.1} parent=1 // pred_check_branch
      %16 = sbr.rel (0) target = $region5
    $region4: #{battle_forward.1} parent=1 // pred_region
      _
    $region5: #{battle_forward.1} parent=1 // pred_fallthru
      _
    // Predicated region
    $region6: #{battle_forward.1} parent=1 // pred_check
      _
    $region7: #{battle_forward.1} parent=1 // pred_check_branch
      %18 = sbr.rel (0) target = $region9
    $region8: #{battle_forward.1} parent=1 // pred_region
      %s20 = ssub.s32 4096, 4096
      %21 = vsyncadd [#allocation3], %s20
      %s22 = sshll.u32 [#allocation2], 4
      %s23 = int_to_ptr.vmem [resolvable:$true] %s22
      %28 = dma.hbm_to_vmem [thread:$0]  %s1, 4096, %s23, [#allocation3], 128, 128, 8
    $region9: #{battle_forward.1} parent=1 // pred_fallthru
      _
    // Predicated region
    $region10: #{battle_forward.1} parent=1 // pred_check
      _
    $region11: #{battle_forward.1} parent=1 // pred_check_branch
      %30 = sbr.rel (0) target = $region13
    $region12: #{battle_forward.1} parent=1 // pred_region
      _
    $region13: #{battle_forward.1} parent=1 // pred_fallthru
      _
    // Predicated region
    $region14: #{battle_forward.1} parent=1 // pred_check
      _
    $region15: #{battle_forward.1} parent=1 // pred_check_branch
      %32 = sbr.rel (0) target = $region17
    $region16: #{battle_forward.1} parent=1 // pred_region
      %s34 = ssub.s32 2048, 2048
      %35 = vsyncadd [#allocation6], %s34
      %s36 = sshll.u32 [#allocation5], 4
      %s37 = int_to_ptr.vmem [resolvable:$true] %s36
      %42 = dma.hbm_to_vmem [thread:$0]  %s3, 2048, %s37, [#allocation6], 128, 128, 8
    $region17: #{battle_forward.1} parent=1 // pred_fallthru
      _
    // Predicated region
    $region18: #{battle_forward.1} parent=1 // pred_check
      _
    $region19: #{battle_forward.1} parent=1 // pred_check_branch
      %44 = sbr.rel (0) target = $region21
    $region20: #{battle_forward.1} parent=1 // pred_region
      _
    $region21: #{battle_forward.1} parent=1 // pred_fallthru
      _
    // Predicated region
    $region22: #{battle_forward.1} parent=1 // pred_check
      _
    $region23: #{battle_forward.1} parent=1 // pred_check_branch
      %46 = sbr.rel (0) target = $region25
    $region24: #{battle_forward.1} parent=1 // pred_region
      %s48 = ssub.s32 2048, 2048
      %49 = vsyncadd [#allocation6], %s48
      %s50 = sshll.u32 [#allocation7], 4
      %s51 = int_to_ptr.vmem [resolvable:$true] %s50
      %56 = dma.hbm_to_vmem [thread:$0]  %s5, 2048, %s51, [#allocation6], 128, 128, 8
    $region25: #{battle_forward.1} parent=1 // pred_fallthru
      _
    // Predicated region
    $region26: #{battle_forward.1} parent=1 // pred_check
      _
    $region27: #{battle_forward.1} parent=1 // pred_check_branch
      %58 = sbr.rel (0) target = $region29
    $region28: #{battle_forward.1} parent=1 // pred_region
      _
    $region29: #{battle_forward.1} parent=1 // pred_fallthru
      _
    // Predicated region
    $region30: #{battle_forward.1} parent=1 // pred_check
      _
    $region31: #{battle_forward.1} parent=1 // pred_check_branch
      %60 = sbr.rel (0) target = $region33
    $region32: #{battle_forward.1} parent=1 // pred_region
      %61 = dma.done [#allocation3], 4096
    $region33: #{battle_forward.1} parent=1 // pred_fallthru
      _
    // Predicated region
    $region34: #{battle_forward.1} parent=1 // pred_check
      _
    $region35: #{battle_forward.1} parent=1 // pred_check_branch
      %63 = sbr.rel (0) target = $region37
    $region36: #{battle_forward.1} parent=1 // pred_region
      %64 = dma.done [#allocation6], 2048
    $region37: #{battle_forward.1} parent=1 // pred_fallthru
      _
    // Predicated region
    $region38: #{battle_forward.1} parent=1 // pred_check
      _
    $region39: #{battle_forward.1} parent=1 // pred_check_branch
      %66 = sbr.rel (0) target = $region41
    $region40: #{battle_forward.1} parent=1 // pred_region
      %67 = dma.done [#allocation6], 2048
    $region41: #{battle_forward.1} parent=1 // pred_fallthru
      _
    %v68 = vld [vmem:[%s0] sm:$0x3]
    %v69 = vld [vmem:[#allocation2] sm:$0xff]
    %v70 = vld [vmem:[#allocation2 + $0x8] sm:$0xff]
    %v71 = vld [vmem:[#allocation2 + $0x10] sm:$0xff]
    %v72 = vld [vmem:[#allocation2 + $0x18] sm:$0xff]
    %v73 = vld [vmem:[#allocation2 + $0x20] sm:$0xff]
    %v74 = vld [vmem:[#allocation2 + $0x28] sm:$0xff]
    %v75 = vld [vmem:[#allocation2 + $0x30] sm:$0xff]
    %v76 = vld [vmem:[#allocation2 + $0x38] sm:$0xff]
    %v77 = vld [vmem:[#allocation2 + $0x40] sm:$0xff]
    %v78 = vld [vmem:[#allocation2 + $0x48] sm:$0xff]
    %v79 = vld [vmem:[#allocation2 + $0x50] sm:$0xff]
    %v80 = vld [vmem:[#allocation2 + $0x58] sm:$0xff]
    %v81 = vld [vmem:[#allocation2 + $0x60] sm:$0xff]
    %v82 = vld [vmem:[#allocation2 + $0x68] sm:$0xff]
    %v83 = vld [vmem:[#allocation2 + $0x70] sm:$0xff]
    %v84 = vld [vmem:[#allocation2 + $0x78] sm:$0xff]
    %v85 = vld [vmem:[#allocation2 + $0x80] sm:$0xff]
    %v86 = vld [vmem:[#allocation2 + $0x88] sm:$0xff]
    %v87 = vld [vmem:[#allocation2 + $0x90] sm:$0xff]
    %v88 = vld [vmem:[#allocation2 + $0x98] sm:$0xff]
    %v89 = vld [vmem:[#allocation2 + $0xa0] sm:$0xff]
    %v90 = vld [vmem:[#allocation2 + $0xa8] sm:$0xff]
    %v91 = vld [vmem:[#allocation2 + $0xb0] sm:$0xff]
    %v92 = vld [vmem:[#allocation2 + $0xb8] sm:$0xff]
    %v93 = vld [vmem:[#allocation2 + $0xc0] sm:$0xff]
    %v94 = vld [vmem:[#allocation2 + $0xc8] sm:$0xff]
    %v95 = vld [vmem:[#allocation2 + $0xd0] sm:$0xff]
    %v96 = vld [vmem:[#allocation2 + $0xd8] sm:$0xff]
    %v97 = vld [vmem:[#allocation2 + $0xe0] sm:$0xff]
    %v98 = vld [vmem:[#allocation2 + $0xe8] sm:$0xff]
    %v99 = vld [vmem:[#allocation2 + $0xf0] sm:$0xff]
    %v100 = vld [vmem:[#allocation2 + $0xf8] sm:$0xff]
    %v101 = vld [vmem:[%s2] sm:$0x1]
    %v103 = vlaneseq
    %v104 = vshrl.u32 %v103, 7
    %v105 = vsub.s32 0, %v104
    %v106 = vrot.slane %v68, %v105
    %v107 = vlaneseq
    %v108 = vshrl.u32 %v107, 7
    %v109 = vsub.s32 1, %v108
    %v110 = vrot.slane %v68, %v109
    %113 = vmatprep.subr.mxu0 0.0
    %114 = vmatpush1.msra.mxu0 %v84
    %115 = vmatprep.subr.mxu0 0.0
    %116 = vmatpush1.msra.mxu0 %v83
    %117 = vmatprep.subr.mxu0 0.0
    %118 = vmatpush1.msra.mxu0 %v82
    %119 = vmatprep.subr.mxu0 0.0
    %120 = vmatpush1.msra.mxu0 %v81
    %121 = vmatprep.subr.mxu0 0.0
    %122 = vmatpush1.msra.mxu0 %v80
    %123 = vmatprep.subr.mxu0 0.0
    %124 = vmatpush1.msra.mxu0 %v79
    %125 = vmatprep.subr.mxu0 0.0
    %126 = vmatpush1.msra.mxu0 %v78
    %127 = vmatprep.subr.mxu0 0.0
    %128 = vmatpush1.msra.mxu0 %v77
    %129 = vmatprep.subr.mxu0 0.0
    %130 = vmatpush1.msra.mxu0 %v76
    %131 = vmatprep.subr.mxu0 0.0
    %132 = vmatpush1.msra.mxu0 %v75
    %133 = vmatprep.subr.mxu0 0.0
    %134 = vmatpush1.msra.mxu0 %v74
    %135 = vmatprep.subr.mxu0 0.0
    %136 = vmatpush1.msra.mxu0 %v73
    %137 = vmatprep.subr.mxu0 0.0
    %138 = vmatpush1.msra.mxu0 %v72
    %139 = vmatprep.subr.mxu0 0.0
    %140 = vmatpush1.msra.mxu0 %v71
    %141 = vmatprep.subr.mxu0 0.0
    %142 = vmatpush1.msra.mxu0 %v70
    %143 = vmatprep.subr.mxu0 0.0
    %144 = vmatpush1.msra.mxu0 %v69
    %145 = vmatprep.subr.mxu0 0.0
    %146 = vmatpush2.msra.mxu0 %v100
    %147 = vmatprep.subr.mxu0 0.0
    %148 = vmatpush2.msra.mxu0 %v99
    %149 = vmatprep.subr.mxu0 0.0
    %150 = vmatpush2.msra.mxu0 %v98
    %151 = vmatprep.subr.mxu0 0.0
    %152 = vmatpush2.msra.mxu0 %v97
    %153 = vmatprep.subr.mxu0 0.0
    %154 = vmatpush2.msra.mxu0 %v96
    %155 = vmatprep.subr.mxu0 0.0
    %156 = vmatpush2.msra.mxu0 %v95
    %157 = vmatprep.subr.mxu0 0.0
    %158 = vmatpush2.msra.mxu0 %v94
    %159 = vmatprep.subr.mxu0 0.0
    %160 = vmatpush2.msra.mxu0 %v93
    %161 = vmatprep.subr.mxu0 0.0
    %162 = vmatpush2.msra.mxu0 %v92
    %163 = vmatprep.subr.mxu0 0.0
    %164 = vmatpush2.msra.mxu0 %v91
    %165 = vmatprep.subr.mxu0 0.0
    %166 = vmatpush2.msra.mxu0 %v90
    %167 = vmatprep.subr.mxu0 0.0
    %168 = vmatpush2.msra.mxu0 %v89
    %169 = vmatprep.subr.mxu0 0.0
    %170 = vmatpush2.msra.mxu0 %v88
    %171 = vmatprep.subr.mxu0 0.0
    %172 = vmatpush2.msra.mxu0 %v87
    %173 = vmatprep.subr.mxu0 0.0
    %174 = vmatpush2.msra.mxu0 %v86
    %175 = vmatprep.subr.mxu0 0.0
    %176 = vmatpush2.msra.mxu0 %v85
    %177 = vmatprep.mubr.f32.mxu0 %v110
    %178 = vmatmul.mubr.f32.gmra.mxu0 %v106
    %v179 = vpop.f32.mrf.mxu0
    %v180 = vadd.f32 %v101, %v179
    %v181 = vpop.f32.mrf.mxu0
    %182 = vdwg.mxu0
    %v183 = vmax.f32 %v180, 0.0
    %v184 = vld [vmem:[#allocation5] sm:$0xff]
    %v185 = vld [vmem:[#allocation5 + $0x8] sm:$0xff]
    %v186 = vld [vmem:[#allocation5 + $0x10] sm:$0xff]
    %v187 = vld [vmem:[#allocation5 + $0x18] sm:$0xff]
    %v188 = vld [vmem:[#allocation5 + $0x20] sm:$0xff]
    %v189 = vld [vmem:[#allocation5 + $0x28] sm:$0xff]
    %v190 = vld [vmem:[#allocation5 + $0x30] sm:$0xff]
    %v191 = vld [vmem:[#allocation5 + $0x38] sm:$0xff]
    %v192 = vld [vmem:[#allocation5 + $0x40] sm:$0xff]
    %v193 = vld [vmem:[#allocation5 + $0x48] sm:$0xff]
    %v194 = vld [vmem:[#allocation5 + $0x50] sm:$0xff]
    %v195 = vld [vmem:[#allocation5 + $0x58] sm:$0xff]
    %v196 = vld [vmem:[#allocation5 + $0x60] sm:$0xff]
    %v197 = vld [vmem:[#allocation5 + $0x68] sm:$0xff]
    %v198 = vld [vmem:[#allocation5 + $0x70] sm:$0xff]
    %v199 = vld [vmem:[#allocation5 + $0x78] sm:$0xff]
    %v200 = vld [vmem:[%s4] sm:$0x1]
    %201 = vmatprep.subr.mxu0 0.0
    %202 = vmatpush1.msra.mxu0 %v199
    %203 = vmatprep.subr.mxu0 0.0
    %204 = vmatpush1.msra.mxu0 %v198
    %205 = vmatprep.subr.mxu0 0.0
    %206 = vmatpush1.msra.mxu0 %v197
    %207 = vmatprep.subr.mxu0 0.0
    %208 = vmatpush1.msra.mxu0 %v196
    %209 = vmatprep.subr.mxu0 0.0
    %210 = vmatpush1.msra.mxu0 %v195
    %211 = vmatprep.subr.mxu0 0.0
    %212 = vmatpush1.msra.mxu0 %v194
    %213 = vmatprep.subr.mxu0 0.0
    %214 = vmatpush1.msra.mxu0 %v193
    %215 = vmatprep.subr.mxu0 0.0
    %216 = vmatpush1.msra.mxu0 %v192
    %217 = vmatprep.subr.mxu0 0.0
    %218 = vmatpush1.msra.mxu0 %v191
    %219 = vmatprep.subr.mxu0 0.0
    %220 = vmatpush1.msra.mxu0 %v190
    %221 = vmatprep.subr.mxu0 0.0
    %222 = vmatpush1.msra.mxu0 %v189
    %223 = vmatprep.subr.mxu0 0.0
    %224 = vmatpush1.msra.mxu0 %v188
    %225 = vmatprep.subr.mxu0 0.0
    %226 = vmatpush1.msra.mxu0 %v187
    %227 = vmatprep.subr.mxu0 0.0
    %228 = vmatpush1.msra.mxu0 %v186
    %229 = vmatprep.subr.mxu0 0.0
    %230 = vmatpush1.msra.mxu0 %v185
    %231 = vmatprep.subr.mxu0 0.0
    %232 = vmatpush1.msra.mxu0 %v184
    %233 = vmatprep.subr.mxu0 0.0
    %234 = vmatpush2.msra.mxu0 0.0
    %235 = vmatprep.subr.mxu0 0.0
    %236 = vmatpush2.msra.mxu0 0.0
    %237 = vmatprep.subr.mxu0 0.0
    %238 = vmatpush2.msra.mxu0 0.0
    %239 = vmatprep.subr.mxu0 0.0
    %240 = vmatpush2.msra.mxu0 0.0
    %241 = vmatprep.subr.mxu0 0.0
    %242 = vmatpush2.msra.mxu0 0.0
    %243 = vmatprep.subr.mxu0 0.0
    %244 = vmatpush2.msra.mxu0 0.0
    %245 = vmatprep.subr.mxu0 0.0
    %246 = vmatpush2.msra.mxu0 0.0
    %247 = vmatprep.subr.mxu0 0.0
    %248 = vmatpush2.msra.mxu0 0.0
    %249 = vmatprep.subr.mxu0 0.0
    %250 = vmatpush2.msra.mxu0 0.0
    %251 = vmatprep.subr.mxu0 0.0
    %252 = vmatpush2.msra.mxu0 0.0
    %253 = vmatprep.subr.mxu0 0.0
    %254 = vmatpush2.msra.mxu0 0.0
    %255 = vmatprep.subr.mxu0 0.0
    %256 = vmatpush2.msra.mxu0 0.0
    %257 = vmatprep.subr.mxu0 0.0
    %258 = vmatpush2.msra.mxu0 0.0
    %259 = vmatprep.subr.mxu0 0.0
    %260 = vmatpush2.msra.mxu0 0.0
    %261 = vmatprep.subr.mxu0 0.0
    %262 = vmatpush2.msra.mxu0 0.0
    %263 = vmatprep.subr.mxu0 0.0
    %264 = vmatpush2.msra.mxu0 0.0
    %265 = vmatprep.mubr.f32.mxu0 0.0
    %266 = vmatmul.mubr.f32.gmra.mxu0 %v183
    %v267 = vpop.f32.mrf.mxu0
    %v268 = vadd.f32 %v200, %v267
    %v269 = vpop.f32.mrf.mxu0
    %270 = vdwg.mxu0
    %vm271 = vcmask 1040384
    %v272 = vsel %vm271, %v268, -inf
    %273 = vmax.xlane.f32.xlu0 %v272
    %v274 = vpop.xlane.xlu0 %273
    %v275 = vsub.f32 %v268, %v274
    %v276 = vmul.f32 %v275, 1.442695
    %v277 = vpow.pop %v276
    %v278 = vsel %vm271, %v277, 0.0
    %279 = vadd.xlane.f32.xlu0 %v278
    %v280 = vpop.xlane.xlu0 %279
    %v281 = vrcp.pop %v280
    %v282 = vmul.f32 %v280, %v281
    %v283 = vsub.f32 2.0, %v282
    %v284 = vmul.f32 %v281, %v283
    %v285 = vmul.f32 %v277, %v284
    %v286 = vld [vmem:[#allocation7] sm:$0xff]
    %v287 = vld [vmem:[#allocation7 + $0x8] sm:$0xff]
    %v288 = vld [vmem:[#allocation7 + $0x10] sm:$0xff]
    %v289 = vld [vmem:[#allocation7 + $0x18] sm:$0xff]
    %v290 = vld [vmem:[#allocation7 + $0x20] sm:$0xff]
    %v291 = vld [vmem:[#allocation7 + $0x28] sm:$0xff]
    %v292 = vld [vmem:[#allocation7 + $0x30] sm:$0xff]
    %v293 = vld [vmem:[#allocation7 + $0x38] sm:$0xff]
    %v294 = vld [vmem:[#allocation7 + $0x40] sm:$0xff]
    %v295 = vld [vmem:[#allocation7 + $0x48] sm:$0xff]
    %v296 = vld [vmem:[#allocation7 + $0x50] sm:$0xff]
    %v297 = vld [vmem:[#allocation7 + $0x58] sm:$0xff]
    %v298 = vld [vmem:[#allocation7 + $0x60] sm:$0xff]
    %v299 = vld [vmem:[#allocation7 + $0x68] sm:$0xff]
    %v300 = vld [vmem:[#allocation7 + $0x70] sm:$0xff]
    %v301 = vld [vmem:[#allocation7 + $0x78] sm:$0xff]
    %v302 = vld [vmem:[%s6] sm:$0x1]
    %303 = vmatprep.subr.mxu0 0.0
    %304 = vmatpush1.msra.mxu0 %v301
    %305 = vmatprep.subr.mxu0 0.0
    %306 = vmatpush1.msra.mxu0 %v300
    %307 = vmatprep.subr.mxu0 0.0
    %308 = vmatpush1.msra.mxu0 %v299
    %309 = vmatprep.subr.mxu0 0.0
    %310 = vmatpush1.msra.mxu0 %v298
    %311 = vmatprep.subr.mxu0 0.0
    %312 = vmatpush1.msra.mxu0 %v297
    %313 = vmatprep.subr.mxu0 0.0
    %314 = vmatpush1.msra.mxu0 %v296
    %315 = vmatprep.subr.mxu0 0.0
    %316 = vmatpush1.msra.mxu0 %v295
    %317 = vmatprep.subr.mxu0 0.0
    %318 = vmatpush1.msra.mxu0 %v294
    %319 = vmatprep.subr.mxu0 0.0
    %320 = vmatpush1.msra.mxu0 %v293
    %321 = vmatprep.subr.mxu0 0.0
    %322 = vmatpush1.msra.mxu0 %v292
    %323 = vmatprep.subr.mxu0 0.0
    %324 = vmatpush1.msra.mxu0 %v291
    %325 = vmatprep.subr.mxu0 0.0
    %326 = vmatpush1.msra.mxu0 %v290
    %327 = vmatprep.subr.mxu0 0.0
    %328 = vmatpush1.msra.mxu0 %v289
    %329 = vmatprep.subr.mxu0 0.0
    %330 = vmatpush1.msra.mxu0 %v288
    %331 = vmatprep.subr.mxu0 0.0
    %332 = vmatpush1.msra.mxu0 %v287
    %333 = vmatprep.subr.mxu0 0.0
    %334 = vmatpush1.msra.mxu0 %v286
    %335 = vmatprep.subr.mxu0 0.0
    %336 = vmatpush2.msra.mxu0 0.0
    %337 = vmatprep.subr.mxu0 0.0
    %338 = vmatpush2.msra.mxu0 0.0
    %339 = vmatprep.subr.mxu0 0.0
    %340 = vmatpush2.msra.mxu0 0.0
    %341 = vmatprep.subr.mxu0 0.0
    %342 = vmatpush2.msra.mxu0 0.0
    %343 = vmatprep.subr.mxu0 0.0
    %344 = vmatpush2.msra.mxu0 0.0
    %345 = vmatprep.subr.mxu0 0.0
    %346 = vmatpush2.msra.mxu0 0.0
    %347 = vmatprep.subr.mxu0 0.0
    %348 = vmatpush2.msra.mxu0 0.0
    %349 = vmatprep.subr.mxu0 0.0
    %350 = vmatpush2.msra.mxu0 0.0
    %351 = vmatprep.subr.mxu0 0.0
    %352 = vmatpush2.msra.mxu0 0.0
    %353 = vmatprep.subr.mxu0 0.0
    %354 = vmatpush2.msra.mxu0 0.0
    %355 = vmatprep.subr.mxu0 0.0
    %356 = vmatpush2.msra.mxu0 0.0
    %357 = vmatprep.subr.mxu0 0.0
    %358 = vmatpush2.msra.mxu0 0.0
    %359 = vmatprep.subr.mxu0 0.0
    %360 = vmatpush2.msra.mxu0 0.0
    %361 = vmatprep.subr.mxu0 0.0
    %362 = vmatpush2.msra.mxu0 0.0
    %363 = vmatprep.subr.mxu0 0.0
    %364 = vmatpush2.msra.mxu0 0.0
    %365 = vmatprep.subr.mxu0 0.0
    %366 = vmatpush2.msra.mxu0 0.0
    %367 = vmatprep.mubr.f32.mxu0 0.0
    %368 = vmatmul.mubr.f32.gmra.mxu0 %v285
    %v369 = vpop.f32.mrf.mxu0
    %v370 = vadd.f32 %v302, %v369
    %v371 = vpop.f32.mrf.mxu0
    %372 = vdwg.mxu0
    %v373 = vsel %vm271, %v370, -inf
    %374 = vmax.xlane.f32.xlu0 %v373
    %v375 = vpop.xlane.xlu0 %374
    %v376 = vsub.f32 %v370, %v375
    %v377 = vmul.f32 %v376, 1.442695
    %v378 = vpow.pop %v377
    %v379 = vsel %vm271, %v378, 0.0
    %380 = vadd.xlane.f32.xlu0 %v379
    %v381 = vpop.xlane.xlu0 %380
    %v382 = vrcp.pop %v381
    %v383 = vmul.f32 %v381, %v382
    %v384 = vsub.f32 2.0, %v383
    %v385 = vmul.f32 %v382, %v384
    %v386 = vmul.f32 %v378, %v385
    %387 = vst [vmem:[#allocation8] sm:$0x1] %v386
    // Predicated region
    $region42: #{battle_forward.1} parent=1 // pred_check
      _
    $region43: #{battle_forward.1} parent=1 // pred_check_branch
      %389 = sbr.rel (0) target = $region45
    $region44: #{battle_forward.1} parent=1 // pred_region
      %s391 = ssub.s32 16, 16
      %392 = vsyncadd [#allocation4], %s391
      %s394 = sshll.u32 [#allocation8], 4
      %s395 = int_to_ptr.vmem [resolvable:$true] %s394
      %397 = dma.vmem_to_hbm [thread:$0]  %s395, 16, %s7, [#allocation4]
    $region45: #{battle_forward.1} parent=1 // pred_fallthru
      _
    // Predicated region
    $region46: #{battle_forward.1} parent=1 // pred_check
      _
    $region47: #{battle_forward.1} parent=1 // pred_check_branch
      %399 = sbr.rel (0) target = $region49
    $region48: #{battle_forward.1} parent=1 // pred_region
      %400 = dma.done [#allocation4], 16
    $region49: #{battle_forward.1} parent=1 // pred_fallthru
      _
    %401 = vsyncpa [#allocation3], 1
    %402 = vsyncpa [#allocation6], 1
    %403 = vsyncpa [#allocation4], 1

</llo_original>
